<compile_context>
chip_gen: v7x
topology: tpu7x:2x2x1
jax: 0.10.0
libtpu: 0.0.40
codegen_flags: <defaults>
</compile_context>

<pallas_src>
import numpy as np
import jax
import jax.numpy as jnp
from jax.experimental import pallas as pl
from jax.experimental.pallas import tpu as pltpu


def _lane_dense_num_classes(ncls, h):
    """Smallest m >= ncls such that h*m is a multiple of 128 (unmasked logits store)."""
    m = ncls
    while (h * m) % 128 != 0:
        m += 1
    return m


# ---------------------------------------------------------------------------
# Fused kernel: backbone stand-in -> folded layer1·layer2 -> classifier
# Single grid step; whole batch handled with a static unroll over N.
# ---------------------------------------------------------------------------
def _fused_forward_kernel(x_ref, wb_ref, bb_ref, w12_ref, b12_ref,
                          wck_ref, bck_ref, out_ref, logits_ref):
    """Channels-first flattened layout.

    x_ref      : (N, C_in, H*W)       bf16  input (NCHW with HW flattened)
    wb_ref     : (F1, C_in)           bf16  backbone stand-in 1x1 conv weight
    bb_ref     : (F1, 1)              f32   backbone stand-in bias
    w12_ref    : (F1, F1)             bf16  folded layer2@layer1 weight
    b12_ref    : (F1, 1)              f32   folded layer2/layer1 bias
    wck_ref    : (H*W, H*ncls_pad)    bf16  kron(I_H, Wc^T), class dim lane-padded
    bck_ref    : (1, H*ncls_pad)      f32   classifier bias tiled over H
    out_ref    : (N, F1, H*W)         f32   `out` (layer2 output, NCHW flattened)
    logits_ref : (N, F1, H*ncls_pad)  f32   classifier output, (H, ncls_pad) flattened
    """
    wb = wb_ref[...]
    bb = bb_ref[...]
    w12 = w12_ref[...]
    b12 = b12_ref[...]
    wck = wck_ref[...]
    bck = bck_ref[...]

    n = x_ref.shape[0]
    for b in range(n):  # static unroll; N is tiny
        xb = x_ref[b]                                                # (C_in, HW) bf16
        # backbone stand-in: 1x1 conv + ReLU (bf16 MXU operands, f32 accumulate)
        h = jnp.dot(wb, xb, preferred_element_type=jnp.float32) + bb
        h = jnp.maximum(h, 0.0)
        # layer1 + layer2 folded into a single 1x1 conv
        out = jnp.dot(w12, h.astype(jnp.bfloat16),
                      preferred_element_type=jnp.float32) + b12
        out_ref[b] = out.astype(out_ref.dtype)
        # classifier (nn.Linear over the W axis) lifted onto the flattened H*W lane axis
        logits = jnp.dot(out.astype(jnp.bfloat16), wck,
                         preferred_element_type=jnp.float32) + bck
        logits_ref[b] = logits.astype(logits_ref.dtype)


# ---------------------------------------------------------------------------
# One-time weight preparation (hoisted out of the forward path)
# ---------------------------------------------------------------------------
def prepare_params(params, h):
    """Fold layer1/layer2, kron-lift the classifier over H with a lane-dense padded
    class dim, and cast MXU operands to bf16.  Call once; reuse the result."""
    ncls = params["wc_t"].shape[1]
    ncls_pad = _lane_dense_num_classes(ncls, h)

    # Valid fold: no nonlinearity/BN between layer1 and layer2 in the PyTorch forward.
    w12 = params["w2"] @ params["w1"]
    b12 = params["w2"] @ params["b1"] + params["b2"]

    wc_pad = jnp.pad(params["wc_t"], ((0, 0), (0, ncls_pad - ncls)))
    bc_pad = jnp.pad(params["bc"], ((0, 0), (0, ncls_pad - ncls)))
    wck = jnp.kron(jnp.eye(h, dtype=params["wc_t"].dtype), wc_pad)   # (H*W, H*ncls_pad)
    bck = jnp.tile(bc_pad, (1, h))                                   # (1, H*ncls_pad)

    prepared = {
        "wb": params["wb"].astype(jnp.bfloat16),
        "bb": params["bb"].astype(jnp.float32),
        "w12": w12.astype(jnp.bfloat16),
        "b12": b12.astype(jnp.float32),
        "wck": wck.astype(jnp.bfloat16),
        "bck": bck.astype(jnp.float32),
    }
    prepared = jax.block_until_ready(prepared)
    meta = {"h": h, "num_classes": ncls, "num_classes_padded": ncls_pad}
    return prepared, meta


# ---------------------------------------------------------------------------
# Forward builder: prepared weights are baked into the jitted call as constants
# ---------------------------------------------------------------------------
def make_forward(prepared, meta):
    wb, bb = prepared["wb"], prepared["bb"]
    w12, b12 = prepared["w12"], prepared["b12"]
    wck, bck = prepared["wck"], prepared["bck"]
    ncls = meta["num_classes"]
    ncls_pad = meta["num_classes_padded"]

    @jax.jit
    def forward(x_nchw):
        n, cin, h, w = x_nchw.shape
        hw = h * w
        f1 = wb.shape[0]
        if h != meta["h"]:
            raise ValueError(f"prepared for H={meta['h']}, got H={h}")
        if wck.shape[0] != hw:
            # Inherited from the PyTorch code: Linear(F1+F2, ncls) acts on the W axis.
            raise ValueError("W (last spatial dim) must equal classifier in_features (F1+F2)")

        x_flat = x_nchw.reshape(n, cin, hw)          # contiguous, no transpose
        if x_flat.dtype != jnp.bfloat16:
            x_flat = x_flat.astype(jnp.bfloat16)     # prefer feeding bf16 at the producer

        out_flat, logits_flat = pl.pallas_call(
            _fused_forward_kernel,
            out_shape=(
                jax.ShapeDtypeStruct((n, f1, hw), jnp.float32),           # `out`
                jax.ShapeDtypeStruct((n, f1, h * ncls_pad), jnp.float32),  # padded logits
            ),
            grid_spec=pltpu.PrefetchScalarGridSpec(
                num_scalar_prefetch=0,
                grid=(1,),
                in_specs=[
                    pl.BlockSpec((n, cin, hw), lambda i: (0, 0, 0)),       # x (whole batch)
                    pl.BlockSpec((f1, cin), lambda i: (0, 0)),             # backbone-standin W
                    pl.BlockSpec((f1, 1), lambda i: (0, 0)),               # backbone-standin b
                    pl.BlockSpec((f1, f1), lambda i: (0, 0)),              # folded layer1/2 W
                    pl.BlockSpec((f1, 1), lambda i: (0, 0)),               # folded layer1/2 b
                    pl.BlockSpec((hw, h * ncls_pad), lambda i: (0, 0)),    # kron classifier W
                    pl.BlockSpec((1, h * ncls_pad), lambda i: (0, 0)),     # tiled classifier b
                ],
                out_specs=[
                    pl.BlockSpec((n, f1, hw), lambda i: (0, 0, 0)),
                    pl.BlockSpec((n, f1, h * ncls_pad), lambda i: (0, 0, 0)),
                ],
            ),
            compiler_params=pltpu.CompilerParams(dimension_semantics=("arbitrary",)),
        )(x_flat, wb, bb, w12, b12, wck, bck)

        out = out_flat.reshape(n, f1, h, w)                                # NCHW `out`
        logits = logits_flat.reshape(n, f1, h, ncls_pad)[..., :ncls]       # drop lane padding
        return out, logits

    return forward


def model_forward(x_nchw, forward_fn):
    """Reproduces Model.forward: returns (out as host numpy, logits) like PyTorch."""
    out, logits = forward_fn(x_nchw)
    return np.asarray(jax.device_get(out)), logits   # out.detach().cpu().numpy() equivalent


# ---------------------------------------------------------------------------
# Deterministic parameter construction (conv-style (out, in) orientation)
# ---------------------------------------------------------------------------
def make_params(key, c_in, f1, w_in, num_classes):
    ks = jax.random.split(key, 8)
    s = 0.1
    return {
        # backbone stand-in 1x1 conv (C_in -> F1)
        "wb": s * jax.random.normal(ks[0], (f1, c_in), jnp.float32),
        "bb": s * jax.random.normal(ks[1], (f1, 1), jnp.float32),
        # layer1: Conv2d(F1, F1, 1)
        "w1": s * jax.random.normal(ks[2], (f1, f1), jnp.float32),
        "b1": s * jax.random.normal(ks[3], (f1, 1), jnp.float32),
        # layer2: Conv2d(F1, F1, 1)
        "w2": s * jax.random.normal(ks[4], (f1, f1), jnp.float32),
        "b2": s * jax.random.normal(ks[5], (f1, 1), jnp.float32),
        # classifier: Linear(F1 + F2, num_classes); stored transposed (W_in, num_classes)
        "wc_t": s * jax.random.normal(ks[6], (w_in, num_classes), jnp.float32),
        "bc": s * jax.random.normal(ks[7], (1, num_classes), jnp.float32),
    }


# ---------------------------------------------------------------------------
# Demo
# ---------------------------------------------------------------------------
if __name__ == "__main__":
    N, C_IN, H = 2, 4, 16
    FEATURE_DIM_1 = 16
    FEATURE_DIM_2 = 16
    NUM_CLASSES = 10
    # The literal PyTorch code applies Linear(F1+F2, num_classes) to the last (W) axis
    # of an NCHW tensor, so W must equal F1 + F2.
    W = FEATURE_DIM_1 + FEATURE_DIM_2  # 32

    key = jax.random.PRNGKey(0)
    k_x, k_p = jax.random.split(key)
    x = jax.random.normal(k_x, (N, C_IN, H, W), jnp.float32)   # NCHW, like PyTorch
    params = make_params(k_p, C_IN, FEATURE_DIM_1, W, NUM_CLASSES)

    # one-time prep (hoisted out of the per-call path) + forward builder
    prepared, meta = prepare_params(params, h=H)
    forward_fn = make_forward(prepared, meta)

    # feed x already in bf16 (producer-side cast): per-call path is a single pallas_call
    x_bf16 = x.astype(jnp.bfloat16)

    out_np, logits = model_forward(x_bf16, forward_fn)
    jax.block_until_ready(logits)

    # --- numerical smoke test vs. a plain-jnp f32 reference of the same math ---
    xf = x_bf16.astype(jnp.float32)
    h_ref = jnp.maximum(jnp.einsum('fc,nchw->nfhw', params["wb"], xf)
                        + params["bb"].reshape(1, -1, 1, 1), 0.0)
    o1_ref = jnp.einsum('gf,nfhw->nghw', params["w1"], h_ref) + params["b1"].reshape(1, -1, 1, 1)
    out_ref = jnp.einsum('gf,nfhw->nghw', params["w2"], o1_ref) + params["b2"].reshape(1, -1, 1, 1)
    logits_ref = (jnp.einsum('nfhw,wk->nfhk', out_ref, params["wc_t"])
                  + params["bc"].reshape(1, 1, 1, -1))
    np.testing.assert_allclose(out_np, np.asarray(out_ref), rtol=0.1, atol=1e-2)
    np.testing.assert_allclose(np.asarray(logits), np.asarray(logits_ref), rtol=0.1, atol=1e-2)

    assert out_np.shape == (N, FEATURE_DIM_1, H, W)
    assert logits.shape == (N, FEATURE_DIM_1, H, NUM_CLASSES)
    assert np.isfinite(out_np).all()
    assert np.isfinite(np.asarray(logits)).all()

    print("KERNEL_OK")
</pallas_src>

<mosaic_0001>
module attributes {stable_mosaic.version = 11 : i64} {
  func.func @_fused_forward_kernel(%arg0: i32, %arg1: memref<2x4x512xbf16, #tpu.memory_space<vmem>>, %arg2: memref<16x4xbf16, #tpu.memory_space<vmem>>, %arg3: memref<16x1xf32, #tpu.memory_space<vmem>>, %arg4: memref<16x16xbf16, #tpu.memory_space<vmem>>, %arg5: memref<16x1xf32, #tpu.memory_space<vmem>>, %arg6: memref<512x256xbf16, #tpu.memory_space<vmem>>, %arg7: memref<1x256xf32, #tpu.memory_space<vmem>>, %arg8: memref<2x16x512xf32, #tpu.memory_space<vmem>>, %arg9: memref<2x16x256xf32, #tpu.memory_space<vmem>>) attributes {dimension_semantics = [#tpu.dimension_semantics<arbitrary>], iteration_bounds = array<i64: 1>, scalar_prefetch = 0 : i64, scratch_operands = 0 : i64, tpu.core_type = #tpu.core_type<tc>, window_params = [{pipeline_mode = #tpu.pipeline_mode<synchronous>, transform_indices = @transform_0, window_bounds = array<i64: 2, 4, 512>}, {pipeline_mode = #tpu.pipeline_mode<synchronous>, transform_indices = @transform_1, window_bounds = array<i64: 16, 4>}, {pipeline_mode = #tpu.pipeline_mode<synchronous>, transform_indices = @transform_2, window_bounds = array<i64: 16, 1>}, {pipeline_mode = #tpu.pipeline_mode<synchronous>, transform_indices = @transform_3, window_bounds = array<i64: 16, 16>}, {pipeline_mode = #tpu.pipeline_mode<synchronous>, transform_indices = @transform_4, window_bounds = array<i64: 16, 1>}, {pipeline_mode = #tpu.pipeline_mode<synchronous>, transform_indices = @transform_5, window_bounds = array<i64: 512, 256>}, {pipeline_mode = #tpu.pipeline_mode<synchronous>, transform_indices = @transform_6, window_bounds = array<i64: 1, 256>}, {pipeline_mode = #tpu.pipeline_mode<synchronous>, transform_indices = @transform_7, window_bounds = array<i64: 2, 16, 512>}, {pipeline_mode = #tpu.pipeline_mode<synchronous>, transform_indices = @transform_8, window_bounds = array<i64: 2, 16, 256>}]} {
    %c0 = arith.constant 0 : index
    %c0_0 = arith.constant 0 : index
    %0 = vector.load %arg2[%c0, %c0_0] : memref<16x4xbf16, #tpu.memory_space<vmem>>, vector<16x4xbf16>
    %c0_1 = arith.constant 0 : index
    %c0_2 = arith.constant 0 : index
    %1 = vector.load %arg3[%c0_1, %c0_2] : memref<16x1xf32, #tpu.memory_space<vmem>>, vector<16x1xf32>
    %c0_3 = arith.constant 0 : index
    %c0_4 = arith.constant 0 : index
    %2 = vector.load %arg4[%c0_3, %c0_4] : memref<16x16xbf16, #tpu.memory_space<vmem>>, vector<16x16xbf16>
    %c0_5 = arith.constant 0 : index
    %c0_6 = arith.constant 0 : index
    %3 = vector.load %arg5[%c0_5, %c0_6] : memref<16x1xf32, #tpu.memory_space<vmem>>, vector<16x1xf32>
    %c0_7 = arith.constant 0 : index
    %c0_8 = arith.constant 0 : index
    %4 = vector.load %arg6[%c0_7, %c0_8] : memref<512x256xbf16, #tpu.memory_space<vmem>>, vector<512x256xbf16>
    %c0_9 = arith.constant 0 : index
    %c0_10 = arith.constant 0 : index
    %5 = vector.load %arg7[%c0_9, %c0_10] : memref<1x256xf32, #tpu.memory_space<vmem>>, vector<1x256xf32>
    %c0_11 = arith.constant 0 : index
    %c0_12 = arith.constant 0 : index
    %c0_13 = arith.constant 0 : index
    %6 = vector.load %arg1[%c0_11, %c0_12, %c0_13] : memref<2x4x512xbf16, #tpu.memory_space<vmem>>, vector<1x4x512xbf16>
    %7 = vector.shape_cast %6 : vector<1x4x512xbf16> to vector<4x512xbf16>
    %cst = arith.constant dense<0.000000e+00> : vector<16x512xf32>
    %8 = tpu.matmul %0, %7, %cst {dimension_numbers = #tpu.dot_dimension_numbers<[1], [0], [0], [1], [0, 0, 1, 1], [], []>} : vector<16x4xbf16>, vector<4x512xbf16>, vector<16x512xf32> -> vector<16x512xf32>
    %9 = vector.broadcast %1 : vector<16x1xf32> to vector<16x512xf32>
    %10 = arith.addf %8, %9 : vector<16x512xf32>
    %cst_14 = arith.constant 0.000000e+00 : f32
    %11 = vector.broadcast %cst_14 : f32 to vector<16x512xf32>
    %12 = arith.maximumf %10, %11 : vector<16x512xf32>
    %13 = arith.truncf %12 : vector<16x512xf32> to vector<16x512xbf16>
    %cst_15 = arith.constant dense<0.000000e+00> : vector<16x512xf32>
    %14 = tpu.matmul %2, %13, %cst_15 {dimension_numbers = #tpu.dot_dimension_numbers<[1], [0], [0], [1], [0, 0, 1, 1], [], []>} : vector<16x16xbf16>, vector<16x512xbf16>, vector<16x512xf32> -> vector<16x512xf32>
    %15 = vector.broadcast %3 : vector<16x1xf32> to vector<16x512xf32>
    %16 = arith.addf %14, %15 : vector<16x512xf32>
    %c0_16 = arith.constant 0 : index
    %c0_17 = arith.constant 0 : index
    %c0_18 = arith.constant 0 : index
    %17 = vector.load %arg8[%c0_16, %c0_17, %c0_18] : memref<2x16x512xf32, #tpu.memory_space<vmem>>, vector<1x16x512xf32>
    %18 = vector.shape_cast %17 : vector<1x16x512xf32> to vector<16x512xf32>
    %19 = vector.shape_cast %16 : vector<16x512xf32> to vector<1x16x512xf32>
    tpu.vector_store %arg8[%c0_16, %c0_17, %c0_18], %19 {strides = array<i32>} : memref<2x16x512xf32, #tpu.memory_space<vmem>>, vector<1x16x512xf32>,
    %20 = arith.truncf %16 : vector<16x512xf32> to vector<16x512xbf16>
    %cst_19 = arith.constant dense<0.000000e+00> : vector<16x256xf32>
    %21 = tpu.matmul %20, %4, %cst_19 {dimension_numbers = #tpu.dot_dimension_numbers<[1], [0], [0], [1], [0, 0, 1, 1], [], []>} : vector<16x512xbf16>, vector<512x256xbf16>, vector<16x256xf32> -> vector<16x256xf32>
    %22 = vector.broadcast %5 : vector<1x256xf32> to vector<16x256xf32>
    %23 = arith.addf %21, %22 : vector<16x256xf32>
    %c0_20 = arith.constant 0 : index
    %c0_21 = arith.constant 0 : index
    %c0_22 = arith.constant 0 : index
    %24 = vector.load %arg9[%c0_20, %c0_21, %c0_22] : memref<2x16x256xf32, #tpu.memory_space<vmem>>, vector<1x16x256xf32>
    %25 = vector.shape_cast %24 : vector<1x16x256xf32> to vector<16x256xf32>
    %26 = vector.shape_cast %23 : vector<16x256xf32> to vector<1x16x256xf32>
    tpu.vector_store %arg9[%c0_20, %c0_21, %c0_22], %26 {strides = array<i32>} : memref<2x16x256xf32, #tpu.memory_space<vmem>>, vector<1x16x256xf32>,
    %c1 = arith.constant 1 : index
    %c0_23 = arith.constant 0 : index
    %c0_24 = arith.constant 0 : index
    %27 = vector.load %arg1[%c1, %c0_23, %c0_24] : memref<2x4x512xbf16, #tpu.memory_space<vmem>>, vector<1x4x512xbf16>
    %28 = vector.shape_cast %27 : vector<1x4x512xbf16> to vector<4x512xbf16>
    %cst_25 = arith.constant dense<0.000000e+00> : vector<16x512xf32>
    %29 = tpu.matmul %0, %28, %cst_25 {dimension_numbers = #tpu.dot_dimension_numbers<[1], [0], [0], [1], [0, 0, 1, 1], [], []>} : vector<16x4xbf16>, vector<4x512xbf16>, vector<16x512xf32> -> vector<16x512xf32>
    %30 = vector.broadcast %1 : vector<16x1xf32> to vector<16x512xf32>
    %31 = arith.addf %29, %30 : vector<16x512xf32>
    %cst_26 = arith.constant 0.000000e+00 : f32
    %32 = vector.broadcast %cst_26 : f32 to vector<16x512xf32>
    %33 = arith.maximumf %31, %32 : vector<16x512xf32>
    %34 = arith.truncf %33 : vector<16x512xf32> to vector<16x512xbf16>
    %cst_27 = arith.constant dense<0.000000e+00> : vector<16x512xf32>
    %35 = tpu.matmul %2, %34, %cst_27 {dimension_numbers = #tpu.dot_dimension_numbers<[1], [0], [0], [1], [0, 0, 1, 1], [], []>} : vector<16x16xbf16>, vector<16x512xbf16>, vector<16x512xf32> -> vector<16x512xf32>
    %36 = vector.broadcast %3 : vector<16x1xf32> to vector<16x512xf32>
    %37 = arith.addf %35, %36 : vector<16x512xf32>
    %c1_28 = arith.constant 1 : index
    %c0_29 = arith.constant 0 : index
    %c0_30 = arith.constant 0 : index
    %38 = vector.load %arg8[%c1_28, %c0_29, %c0_30] : memref<2x16x512xf32, #tpu.memory_space<vmem>>, vector<1x16x512xf32>
    %39 = vector.shape_cast %38 : vector<1x16x512xf32> to vector<16x512xf32>
    %40 = vector.shape_cast %37 : vector<16x512xf32> to vector<1x16x512xf32>
    tpu.vector_store %arg8[%c1_28, %c0_29, %c0_30], %40 {strides = array<i32>} : memref<2x16x512xf32, #tpu.memory_space<vmem>>, vector<1x16x512xf32>,
    %41 = arith.truncf %37 : vector<16x512xf32> to vector<16x512xbf16>
    %cst_31 = arith.constant dense<0.000000e+00> : vector<16x256xf32>
    %42 = tpu.matmul %41, %4, %cst_31 {dimension_numbers = #tpu.dot_dimension_numbers<[1], [0], [0], [1], [0, 0, 1, 1], [], []>} : vector<16x512xbf16>, vector<512x256xbf16>, vector<16x256xf32> -> vector<16x256xf32>
    %43 = vector.broadcast %5 : vector<1x256xf32> to vector<16x256xf32>
    %44 = arith.addf %42, %43 : vector<16x256xf32>
    %c1_32 = arith.constant 1 : index
    %c0_33 = arith.constant 0 : index
    %c0_34 = arith.constant 0 : index
    %45 = vector.load %arg9[%c1_32, %c0_33, %c0_34] : memref<2x16x256xf32, #tpu.memory_space<vmem>>, vector<1x16x256xf32>
    %46 = vector.shape_cast %45 : vector<1x16x256xf32> to vector<16x256xf32>
    %47 = vector.shape_cast %44 : vector<16x256xf32> to vector<1x16x256xf32>
    tpu.vector_store %arg9[%c1_32, %c0_33, %c0_34], %47 {strides = array<i32>} : memref<2x16x256xf32, #tpu.memory_space<vmem>>, vector<1x16x256xf32>,
    return
  }
  func.func @transform_0(%arg0: i32) -> (i32, i32, i32) {
    %c0_i32 = arith.constant 0 : i32
    %c0_i32_0 = arith.constant 0 : i32
    %c0_i32_1 = arith.constant 0 : i32
    %c0_i32_2 = arith.constant 0 : i32
    return %c0_i32, %c0_i32_0, %c0_i32_1 : i32, i32, i32
  }
  func.func @transform_1(%arg0: i32) -> (i32, i32) {
    %c0_i32 = arith.constant 0 : i32
    %c0_i32_0 = arith.constant 0 : i32
    %c0_i32_1 = arith.constant 0 : i32
    return %c0_i32, %c0_i32_0 : i32, i32
  }
  func.func @transform_2(%arg0: i32) -> (i32, i32) {
    %c0_i32 = arith.constant 0 : i32
    %c0_i32_0 = arith.constant 0 : i32
    %c0_i32_1 = arith.constant 0 : i32
    return %c0_i32, %c0_i32_0 : i32, i32
  }
  func.func @transform_3(%arg0: i32) -> (i32, i32) {
    %c0_i32 = arith.constant 0 : i32
    %c0_i32_0 = arith.constant 0 : i32
    %c0_i32_1 = arith.constant 0 : i32
    return %c0_i32, %c0_i32_0 : i32, i32
  }
  func.func @transform_4(%arg0: i32) -> (i32, i32) {
    %c0_i32 = arith.constant 0 : i32
    %c0_i32_0 = arith.constant 0 : i32
    %c0_i32_1 = arith.constant 0 : i32
    return %c0_i32, %c0_i32_0 : i32, i32
  }
  func.func @transform_5(%arg0: i32) -> (i32, i32) {
    %c0_i32 = arith.constant 0 : i32
    %c0_i32_0 = arith.constant 0 : i32
    %c0_i32_1 = arith.constant 0 : i32
    return %c0_i32, %c0_i32_0 : i32, i32
  }
  func.func @transform_6(%arg0: i32) -> (i32, i32) {
    %c0_i32 = arith.constant 0 : i32
    %c0_i32_0 = arith.constant 0 : i32
    %c0_i32_1 = arith.constant 0 : i32
    return %c0_i32, %c0_i32_0 : i32, i32
  }
  func.func @transform_7(%arg0: i32) -> (i32, i32, i32) {
    %c0_i32 = arith.constant 0 : i32
    %c0_i32_0 = arith.constant 0 : i32
    %c0_i32_1 = arith.constant 0 : i32
    %c0_i32_2 = arith.constant 0 : i32
    return %c0_i32, %c0_i32_0, %c0_i32_1 : i32, i32, i32
  }
  func.func @transform_8(%arg0: i32) -> (i32, i32, i32) {
    %c0_i32 = arith.constant 0 : i32
    %c0_i32_0 = arith.constant 0 : i32
    %c0_i32_1 = arith.constant 0 : i32
    %c0_i32_2 = arith.constant 0 : i32
    return %c0_i32, %c0_i32_0, %c0_i32_1 : i32, i32, i32
  }
}

</mosaic_0001>

<llo_original>
// kernel: forward.1
$region0: #{forward.1}
  #allocation0 [shape = 'u32[]', space=smem, size = 0x4, offset = 0x4, fixed_abs, tag = 'smem constant byte address 0x4 - core index']
  #allocation1 [shape = 'u32[144,128]{1,0:T(1,128)}', space=vmem, size = 0x12000, scoped, tag = 'internal scratch']
  %s0 = inlined_call_operand.vmem [shape: bf16[2,4,512], index: 0, kind: input, shape index: {}]
  %s1 = inlined_call_operand.vmem [shape: bf16[16,4], index: 1, kind: input, shape index: {}]
  %s2 = inlined_call_operand.vmem [shape: f32[16,1], index: 2, kind: input, shape index: {}]
  %s3 = inlined_call_operand.vmem [shape: bf16[16,16], index: 3, kind: input, shape index: {}]
  %s4 = inlined_call_operand.vmem [shape: f32[16,1], index: 4, kind: input, shape index: {}]
  %s5 = inlined_call_operand.vmem [shape: bf16[512,256], index: 5, kind: input, shape index: {}]
  %s6 = inlined_call_operand.vmem [shape: f32[1,256], index: 6, kind: input, shape index: {}]
  %s7 = inlined_call_operand.vmem [shape: f32[2,16,512], index: 7, kind: output, shape index: {0}]
  %s8 = inlined_call_operand.vmem [shape: f32[2,16,256], index: 8, kind: output, shape index: {1}]
  %9 = xla_tuple %s7, %s8
  %s10 = sld [smem:[#allocation0]]
  $region46: #{forward.1} parent=0
    _
  %s12 = ssub.s32 1, %s10
  %s13 = scalar_select 0, %s12, %s10
  // Predicated region
  $region2: #{forward.1} parent=0 // pred_check
    _
  $region3: #{forward.1} parent=0 // pred_check_branch
    %15 = sbr.rel (0) target = $region5
  $region4: #{forward.1} parent=0 // pred_region
    _
  $region5: #{forward.1} parent=0 // pred_fallthru
    _
  // Predicated region
  $region6: #{forward.1} parent=0 // pred_check
    _
  $region7: #{forward.1} parent=0 // pred_check_branch
    %17 = sbr.rel (0) target = $region9
  $region8: #{forward.1} parent=0 // pred_region
    _
  $region9: #{forward.1} parent=0 // pred_fallthru
    _
  // Predicated region
  $region10: #{forward.1} parent=0 // pred_check
    _
  $region11: #{forward.1} parent=0 // pred_check_branch
    %19 = sbr.rel (0) target = $region13
  $region12: #{forward.1} parent=0 // pred_region
    _
  $region13: #{forward.1} parent=0 // pred_fallthru
    _
  // Predicated region
  $region14: #{forward.1} parent=0 // pred_check
    _
  $region15: #{forward.1} parent=0 // pred_check_branch
    %21 = sbr.rel (0) target = $region17
  $region16: #{forward.1} parent=0 // pred_region
    _
  $region17: #{forward.1} parent=0 // pred_fallthru
    _
  // Predicated region
  $region18: #{forward.1} parent=0 // pred_check
    _
  $region19: #{forward.1} parent=0 // pred_check_branch
    %23 = sbr.rel (0) target = $region21
  $region20: #{forward.1} parent=0 // pred_region
    _
  $region21: #{forward.1} parent=0 // pred_fallthru
    _
  // Predicated region
  $region22: #{forward.1} parent=0 // pred_check
    _
  $region23: #{forward.1} parent=0 // pred_check_branch
    %25 = sbr.rel (0) target = $region25
  $region24: #{forward.1} parent=0 // pred_region
    _
  $region25: #{forward.1} parent=0 // pred_fallthru
    _
  // Predicated region
  $region26: #{forward.1} parent=0 // pred_check
    _
  $region27: #{forward.1} parent=0 // pred_check_branch
    %27 = sbr.rel (0) target = $region29
  $region28: #{forward.1} parent=0 // pred_region
    _
  $region29: #{forward.1} parent=0 // pred_fallthru
    _
  %v29 = vld [vmem:[%s1] sm:$0xf]
  %v30 = vld [vmem:[%s1 + $0x4] sm:$0xf]
  %v31 = vld [vmem:[%s2] sm:$0xff]
  %v32 = vld [vmem:[%s2 + $0x8] sm:$0xff]
  %v33 = vld [vmem:[%s3] sm:$0xf]
  %v34 = vld [vmem:[%s3 + $0x4] sm:$0xf]
  %v35 = vld [vmem:[%s4] sm:$0xff]
  %v36 = vld [vmem:[%s4 + $0x8] sm:$0xff]
  %v37 = vld [vmem:[%s5] sm:$0xff]
  %v38 = vld [vmem:[%s5 + $0x8] sm:$0xff]
  %v39 = vld [vmem:[%s5 + $0x10] sm:$0xff]
  %v40 = vld [vmem:[%s5 + $0x18] sm:$0xff]
  %v41 = vld [vmem:[%s5 + $0x20] sm:$0xff]
  %v42 = vld [vmem:[%s5 + $0x28] sm:$0xff]
  %v43 = vld [vmem:[%s5 + $0x30] sm:$0xff]
  %v44 = vld [vmem:[%s5 + $0x38] sm:$0xff]
  %v45 = vld [vmem:[%s5 + $0x40] sm:$0xff]
  %v46 = vld [vmem:[%s5 + $0x48] sm:$0xff]
  %v47 = vld [vmem:[%s5 + $0x50] sm:$0xff]
  %v48 = vld [vmem:[%s5 + $0x58] sm:$0xff]
  %v49 = vld [vmem:[%s5 + $0x60] sm:$0xff]
  %v50 = vld [vmem:[%s5 + $0x68] sm:$0xff]
  %v51 = vld [vmem:[%s5 + $0x70] sm:$0xff]
  %v52 = vld [vmem:[%s5 + $0x78] sm:$0xff]
  %v53 = vld [vmem:[%s5 + $0x80] sm:$0xff]
  %v54 = vld [vmem:[%s5 + $0x88] sm:$0xff]
  %v55 = vld [vmem:[%s5 + $0x90] sm:$0xff]
  %v56 = vld [vmem:[%s5 + $0x98] sm:$0xff]
  %v57 = vld [vmem:[%s5 + $0xa0] sm:$0xff]
  %v58 = vld [vmem:[%s5 + $0xa8] sm:$0xff]
  %v59 = vld [vmem:[%s5 + $0xb0] sm:$0xff]
  %v60 = vld [vmem:[%s5 + $0xb8] sm:$0xff]
  %v61 = vld [vmem:[%s5 + $0xc0] sm:$0xff]
  %v62 = vld [vmem:[%s5 + $0xc8] sm:$0xff]
  %v63 = vld [vmem:[%s5 + $0xd0] sm:$0xff]
  %v64 = vld [vmem:[%s5 + $0xd8] sm:$0xff]
  %v65 = vld [vmem:[%s5 + $0xe0] sm:$0xff]
  %v66 = vld [vmem:[%s5 + $0xe8] sm:$0xff]
  %v67 = vld [vmem:[%s5 + $0xf0] sm:$0xff]
  %v68 = vld [vmem:[%s5 + $0xf8] sm:$0xff]
  %v69 = vld [vmem:[%s5 + $0x100] sm:$0xff]
  %v70 = vld [vmem:[%s5 + $0x108] sm:$0xff]
  %v71 = vld [vmem:[%s5 + $0x110] sm:$0xff]
  %v72 = vld [vmem:[%s5 + $0x118] sm:$0xff]
  %v73 = vld [vmem:[%s5 + $0x120] sm:$0xff]
  %v74 = vld [vmem:[%s5 + $0x128] sm:$0xff]
  %v75 = vld [vmem:[%s5 + $0x130] sm:$0xff]
  %v76 = vld [vmem:[%s5 + $0x138] sm:$0xff]
  %v77 = vld [vmem:[%s5 + $0x140] sm:$0xff]
  %v78 = vld [vmem:[%s5 + $0x148] sm:$0xff]
  %v79 = vld [vmem:[%s5 + $0x150] sm:$0xff]
  %v80 = vld [vmem:[%s5 + $0x158] sm:$0xff]
  %v81 = vld [vmem:[%s5 + $0x160] sm:$0xff]
  %v82 = vld [vmem:[%s5 + $0x168] sm:$0xff]
  %v83 = vld [vmem:[%s5 + $0x170] sm:$0xff]
  %v84 = vld [vmem:[%s5 + $0x178] sm:$0xff]
  %v85 = vld [vmem:[%s5 + $0x180] sm:$0xff]
  %v86 = vld [vmem:[%s5 + $0x188] sm:$0xff]
  %v87 = vld [vmem:[%s5 + $0x190] sm:$0xff]
  %v88 = vld [vmem:[%s5 + $0x198] sm:$0xff]
  %v89 = vld [vmem:[%s5 + $0x1a0] sm:$0xff]
  %v90 = vld [vmem:[%s5 + $0x1a8] sm:$0xff]
  %v91 = vld [vmem:[%s5 + $0x1b0] sm:$0xff]
  %v92 = vld [vmem:[%s5 + $0x1b8] sm:$0xff]
  %v93 = vld [vmem:[%s5 + $0x1c0] sm:$0xff]
  %v94 = vld [vmem:[%s5 + $0x1c8] sm:$0xff]
  %v95 = vld [vmem:[%s5 + $0x1d0] sm:$0xff]
  %v96 = vld [vmem:[%s5 + $0x1d8] sm:$0xff]
  %v97 = vld [vmem:[%s5 + $0x1e0] sm:$0xff]
  %v98 = vld [vmem:[%s5 + $0x1e8] sm:$0xff]
  %v99 = vld [vmem:[%s5 + $0x1f0] sm:$0xff]
  %v100 = vld [vmem:[%s5 + $0x1f8] sm:$0xff]
  %v101 = vld [vmem:[%s6] sm:$0x3]
  %v102 = vld [vmem:[%s0] sm:$0xff]
  %104 = vset.pattern.permute.xlu0 0
  %105 = vperm.xlu0 %104, %v31
  %v106 = vpop.permute.xlu0 %105
  %109 = vset.pattern.permute.xlu0 0
  %110 = vperm.xlu0 %109, %v32
  %v111 = vpop.permute.xlu0 %110
  %v115 = vunpack.c.l.b16 %v29
  %v116 = vunpack.c.l.b16 %v30
  %v117 = vpack.c.b16 %v116, %v115
  %v119 = vcombine.high %v102, %v102
  %v121 = vunpack.c.l.s4 1983009808
  %v122 = vunpack.c.0.s8 %v121
  %v123 = vlaneseq
  %v124 = vshrl.u32 %v123, 7
  %v125 = vsub.s32 %v122, %v124
  %v126 = vrot.slane %v102, %v125
  %v128 = vunpack.c.l.s4 1983009808
  %v129 = vunpack.c.0.s8 %v128
  %v130 = vlaneseq
  %v131 = vshrl.u32 %v130, 7
  %v132 = vsub.s32 %v129, %v131
  %v133 = vrot.slane %v119, %v132
  %v134 = vcombine.high %v126, %v126
  %v135 = vcombine.high %v133, %v133
  %vm136 = vcmask 31744
  %v138 = vsel %vm136, %v117, 0
  %vm140 = vcmask 1041408
  %v142 = vsel %vm140, %v126, 0
  %v145 = vsel %vm140, %v134, 0
  %v148 = vsel %vm140, %v133, 0
  %v151 = vsel %vm140, %v135, 0
  %153 = vmatprep.subr.bf16.mxu0 %v145
  %154 = vmatpush1.bf16.msra.mxu0 %v142
  %155 = vmatprep.subr.bf16.mxu0 0
  %156 = vmatpush1.bf16.msra.mxu0 0
  %157 = vmatprep.subr.bf16.mxu0 0
  %158 = vmatpush1.bf16.msra.mxu0 0
  %159 = vmatprep.subr.bf16.mxu0 0
  %160 = vmatpush1.bf16.msra.mxu0 0
  %161 = vmatprep.subr.bf16.mxu0 0
  %162 = vmatpush1.bf16.msra.mxu0 0
  %163 = vmatprep.subr.bf16.mxu0 0
  %164 = vmatpush1.bf16.msra.mxu0 0
  %165 = vmatprep.subr.bf16.mxu0 0
  %166 = vmatpush1.bf16.msra.mxu0 0
  %167 = vmatprep.subr.bf16.mxu0 0
  %168 = vmatpush1.bf16.msra.mxu0 0
  %169 = vmatprep.subr.bf16.mxu0 0
  %170 = vmatpush1.bf16.msra.mxu0 0
  %171 = vmatprep.subr.bf16.mxu0 0
  %172 = vmatpush1.bf16.msra.mxu0 0
  %173 = vmatprep.subr.bf16.mxu0 0
  %174 = vmatpush1.bf16.msra.mxu0 0
  %175 = vmatprep.subr.bf16.mxu0 0
  %176 = vmatpush1.bf16.msra.mxu0 0
  %177 = vmatprep.subr.bf16.mxu0 0
  %178 = vmatpush1.bf16.msra.mxu0 0
  %179 = vmatprep.subr.bf16.mxu0 0
  %180 = vmatpush1.bf16.msra.mxu0 0
  %181 = vmatprep.subr.bf16.mxu0 0
  %182 = vmatpush1.bf16.msra.mxu0 0
  %183 = vmatprep.subr.bf16.mxu0 0
  %184 = vmatpush1.bf16.msra.mxu0 0
  %185 = vmatprep.mubr.bf16.mxu0 0
  %186 = vmatmul.mubr.bf16.gmra.mrb[0].mxu0 %v138
  %v187 = vpop.f32.mrb[0].mxu0
  %v188 = vadd.f32 %v106, %v187
  %v189 = vpop.f32.mrb[0].mxu0
  %v190 = vadd.f32 %v106, %v189
  %v191 = vpop.f32.mrb[0].mxu0
  %v192 = vadd.f32 %v111, %v191
  %v193 = vpop.f32.mrb[0].mxu0
  %v194 = vadd.f32 %v111, %v193
  %195 = vdwg.mxu0
  %196 = vmatprep.subr.bf16.mxu0 %v151
  %197 = vmatpush1.bf16.msra.mxu0 %v148
  %198 = vmatprep.subr.bf16.mxu0 0
  %199 = vmatpush1.bf16.msra.mxu0 0
  %200 = vmatprep.subr.bf16.mxu0 0
  %201 = vmatpush1.bf16.msra.mxu0 0
  %202 = vmatprep.subr.bf16.mxu0 0
  %203 = vmatpush1.bf16.msra.mxu0 0
  %204 = vmatprep.subr.bf16.mxu0 0
  %205 = vmatpush1.bf16.msra.mxu0 0
  %206 = vmatprep.subr.bf16.mxu0 0
  %207 = vmatpush1.bf16.msra.mxu0 0
  %208 = vmatprep.subr.bf16.mxu0 0
  %209 = vmatpush1.bf16.msra.mxu0 0
  %210 = vmatprep.subr.bf16.mxu0 0
  %211 = vmatpush1.bf16.msra.mxu0 0
  %212 = vmatprep.subr.bf16.mxu0 0
  %213 = vmatpush1.bf16.msra.mxu0 0
  %214 = vmatprep.subr.bf16.mxu0 0
  %215 = vmatpush1.bf16.msra.mxu0 0
  %216 = vmatprep.subr.bf16.mxu0 0
  %217 = vmatpush1.bf16.msra.mxu0 0
  %218 = vmatprep.subr.bf16.mxu0 0
  %219 = vmatpush1.bf16.msra.mxu0 0
  %220 = vmatprep.subr.bf16.mxu0 0
  %221 = vmatpush1.bf16.msra.mxu0 0
  %222 = vmatprep.subr.bf16.mxu0 0
  %223 = vmatpush1.bf16.msra.mxu0 0
  %224 = vmatprep.subr.bf16.mxu0 0
  %225 = vmatpush1.bf16.msra.mxu0 0
  %226 = vmatprep.subr.bf16.mxu0 0
  %227 = vmatpush1.bf16.msra.mxu0 0
  %228 = vmatprep.mubr.bf16.mxu0 0
  %229 = vmatmul.mubr.bf16.gmra.mrb[0].mxu0 %v138
  %v230 = vpop.f32.mrb[0].mxu0
  %v231 = vadd.f32 %v106, %v230
  %v232 = vpop.f32.mrb[0].mxu0
  %v233 = vadd.f32 %v106, %v232
  %v234 = vpop.f32.mrb[0].mxu0
  %v235 = vadd.f32 %v111, %v234
  %v236 = vpop.f32.mrb[0].mxu0
  %v237 = vadd.f32 %v111, %v236
  %238 = vdwg.mxu0
  %v239 = vmax.f32 %v188, 0.0
  %v240 = vmax.f32 %v190, 0.0
  %v241 = vmax.f32 %v231, 0.0
  %v242 = vmax.f32 %v233, 0.0
  %v243 = vmax.f32 %v192, 0.0
  %v244 = vmax.f32 %v194, 0.0
  %v245 = vmax.f32 %v235, 0.0
  %v246 = vmax.f32 %v237, 0.0
  %v247 = vpack.c.bf16 %v243, %v239
  %v248 = vpack.c.bf16 %v244, %v240
  %v249 = vpack.c.bf16 %v245, %v241
  %v250 = vpack.c.bf16 %v246, %v242
  %252 = vset.pattern.permute.xlu0 0
  %253 = vperm.xlu0 %252, %v35
  %v254 = vpop.permute.xlu0 %253
  %257 = vset.pattern.permute.xlu0 0
  %258 = vperm.xlu0 %257, %v36
  %v259 = vpop.permute.xlu0 %258
  %v263 = vunpack.c.l.b16 %v33
  %v264 = vunpack.c.l.b16 %v34
  %v265 = vpack.c.b16 %v264, %v263
  %vm266 = vcmask 130048
  %v268 = vsel %vm266, %v265, 0
  %270 = vmatprep.subr.bf16.mxu0 %v248
  %271 = vmatpush1.bf16.msra.mxu0 %v247
  %272 = vmatprep.subr.bf16.mxu0 0
  %273 = vmatpush1.bf16.msra.mxu0 0
  %274 = vmatprep.subr.bf16.mxu0 0
  %275 = vmatpush1.bf16.msra.mxu0 0
  %276 = vmatprep.subr.bf16.mxu0 0
  %277 = vmatpush1.bf16.msra.mxu0 0
  %278 = vmatprep.subr.bf16.mxu0 0
  %279 = vmatpush1.bf16.msra.mxu0 0
  %280 = vmatprep.subr.bf16.mxu0 0
  %281 = vmatpush1.bf16.msra.mxu0 0
  %282 = vmatprep.subr.bf16.mxu0 0
  %283 = vmatpush1.bf16.msra.mxu0 0
  %284 = vmatprep.subr.bf16.mxu0 0
  %285 = vmatpush1.bf16.msra.mxu0 0
  %286 = vmatprep.subr.bf16.mxu0 0
  %287 = vmatpush1.bf16.msra.mxu0 0
  %288 = vmatprep.subr.bf16.mxu0 0
  %289 = vmatpush1.bf16.msra.mxu0 0
  %290 = vmatprep.subr.bf16.mxu0 0
  %291 = vmatpush1.bf16.msra.mxu0 0
  %292 = vmatprep.subr.bf16.mxu0 0
  %293 = vmatpush1.bf16.msra.mxu0 0
  %294 = vmatprep.subr.bf16.mxu0 0
  %295 = vmatpush1.bf16.msra.mxu0 0
  %296 = vmatprep.subr.bf16.mxu0 0
  %297 = vmatpush1.bf16.msra.mxu0 0
  %298 = vmatprep.subr.bf16.mxu0 0
  %299 = vmatpush1.bf16.msra.mxu0 0
  %300 = vmatprep.subr.bf16.mxu0 0
  %301 = vmatpush1.bf16.msra.mxu0 0
  %302 = vmatprep.mubr.bf16.mxu0 0
  %303 = vmatmul.mubr.bf16.gmra.mrb[0].mxu0 %v268
  %v304 = vpop.f32.mrb[0].mxu0
  %v305 = vadd.f32 %v254, %v304
  %v306 = vpop.f32.mrb[0].mxu0
  %v307 = vadd.f32 %v254, %v306
  %v308 = vpop.f32.mrb[0].mxu0
  %v309 = vadd.f32 %v259, %v308
  %v310 = vpop.f32.mrb[0].mxu0
  %v311 = vadd.f32 %v259, %v310
  %312 = vdwg.mxu0
  %313 = vmatprep.subr.bf16.mxu0 %v250
  %314 = vmatpush1.bf16.msra.mxu0 %v249
  %315 = vmatprep.subr.bf16.mxu0 0
  %316 = vmatpush1.bf16.msra.mxu0 0
  %317 = vmatprep.subr.bf16.mxu0 0
  %318 = vmatpush1.bf16.msra.mxu0 0
  %319 = vmatprep.subr.bf16.mxu0 0
  %320 = vmatpush1.bf16.msra.mxu0 0
  %321 = vmatprep.subr.bf16.mxu0 0
  %322 = vmatpush1.bf16.msra.mxu0 0
  %323 = vmatprep.subr.bf16.mxu0 0
  %324 = vmatpush1.bf16.msra.mxu0 0
  %325 = vmatprep.subr.bf16.mxu0 0
  %326 = vmatpush1.bf16.msra.mxu0 0
  %327 = vmatprep.subr.bf16.mxu0 0
  %328 = vmatpush1.bf16.msra.mxu0 0
  %329 = vmatprep.subr.bf16.mxu0 0
  %330 = vmatpush1.bf16.msra.mxu0 0
  %331 = vmatprep.subr.bf16.mxu0 0
  %332 = vmatpush1.bf16.msra.mxu0 0
  %333 = vmatprep.subr.bf16.mxu0 0
  %334 = vmatpush1.bf16.msra.mxu0 0
  %335 = vmatprep.subr.bf16.mxu0 0
  %336 = vmatpush1.bf16.msra.mxu0 0
  %337 = vmatprep.subr.bf16.mxu0 0
  %338 = vmatpush1.bf16.msra.mxu0 0
  %339 = vmatprep.subr.bf16.mxu0 0
  %340 = vmatpush1.bf16.msra.mxu0 0
  %341 = vmatprep.subr.bf16.mxu0 0
  %342 = vmatpush1.bf16.msra.mxu0 0
  %343 = vmatprep.subr.bf16.mxu0 0
  %344 = vmatpush1.bf16.msra.mxu0 0
  %345 = vmatprep.mubr.bf16.mxu0 0
  %346 = vmatmul.mubr.bf16.gmra.mrb[0].mxu0 %v268
  %v347 = vpop.f32.mrb[0].mxu0
  %v348 = vadd.f32 %v254, %v347
  %v349 = vpop.f32.mrb[0].mxu0
  %v350 = vadd.f32 %v254, %v349
  %v351 = vpop.f32.mrb[0].mxu0
  %v352 = vadd.f32 %v259, %v351
  %v353 = vpop.f32.mrb[0].mxu0
  %v354 = vadd.f32 %v259, %v353
  %355 = vdwg.mxu0
  %356 = vst [vmem:[%s7] sm:$0xff] %v305
  %357 = vst [vmem:[%s7 + $0x8] sm:$0xff] %v307
  %358 = vst [vmem:[%s7 + $0x10] sm:$0xff] %v348
  %359 = vst [vmem:[%s7 + $0x18] sm:$0xff] %v350
  %360 = vst [vmem:[%s7 + $0x20] sm:$0xff] %v309
  %361 = vst [vmem:[%s7 + $0x28] sm:$0xff] %v311
  %362 = vst [vmem:[%s7 + $0x30] sm:$0xff] %v352
  %363 = vst [vmem:[%s7 + $0x38] sm:$0xff] %v354
  %v364 = vpack.c.bf16 %v309, %v305
  %v365 = vpack.c.bf16 %v311, %v307
  %v366 = vpack.c.bf16 %v352, %v348
  %v367 = vpack.c.bf16 %v354, %v350
  %v369 = vlaneseq
  %v370 = vshrl.u32 %v369, 7
  %v371 = vsub.s32 0, %v370
  %v372 = vrot.slane %v101, %v371
  %v373 = vlaneseq
  %v374 = vshrl.u32 %v373, 7
  %v375 = vsub.s32 1, %v374
  %v376 = vrot.slane %v101, %v375
  %v443 = vunpack.c.l.b16 %v37
  %v444 = vunpack.c.h.b16 %v37
  %v445 = vunpack.c.l.b16 %v38
  %v446 = vunpack.c.h.b16 %v38
  %v447 = vunpack.c.l.b16 %v39
  %v448 = vunpack.c.h.b16 %v39
  %v449 = vunpack.c.l.b16 %v40
  %v450 = vunpack.c.h.b16 %v40
  %v451 = vunpack.c.l.b16 %v41
  %v452 = vunpack.c.h.b16 %v41
  %v453 = vunpack.c.l.b16 %v42
  %v454 = vunpack.c.h.b16 %v42
  %v455 = vunpack.c.l.b16 %v43
  %v456 = vunpack.c.h.b16 %v43
  %v457 = vunpack.c.l.b16 %v44
  %v458 = vunpack.c.h.b16 %v44
  %v459 = vunpack.c.l.b16 %v45
  %v460 = vunpack.c.h.b16 %v45
  %v461 = vunpack.c.l.b16 %v46
  %v462 = vunpack.c.h.b16 %v46
  %v463 = vunpack.c.l.b16 %v47
  %v464 = vunpack.c.h.b16 %v47
  %v465 = vunpack.c.l.b16 %v48
  %v466 = vunpack.c.h.b16 %v48
  %v467 = vunpack.c.l.b16 %v49
  %v468 = vunpack.c.h.b16 %v49
  %v469 = vunpack.c.l.b16 %v50
  %v470 = vunpack.c.h.b16 %v50
  %v471 = vunpack.c.l.b16 %v51
  %v472 = vunpack.c.h.b16 %v51
  %v473 = vunpack.c.l.b16 %v52
  %v474 = vunpack.c.h.b16 %v52
  %v475 = vunpack.c.l.b16 %v53
  %v476 = vunpack.c.h.b16 %v53
  %v477 = vunpack.c.l.b16 %v54
  %v478 = vunpack.c.h.b16 %v54
  %v479 = vunpack.c.l.b16 %v55
  %v480 = vunpack.c.h.b16 %v55
  %v481 = vunpack.c.l.b16 %v56
  %v482 = vunpack.c.h.b16 %v56
  %v483 = vunpack.c.l.b16 %v57
  %v484 = vunpack.c.h.b16 %v57
  %v485 = vunpack.c.l.b16 %v58
  %v486 = vunpack.c.h.b16 %v58
  %v487 = vunpack.c.l.b16 %v59
  %v488 = vunpack.c.h.b16 %v59
  %v489 = vunpack.c.l.b16 %v60
  %v490 = vunpack.c.h.b16 %v60
  %v491 = vunpack.c.l.b16 %v61
  %v492 = vunpack.c.h.b16 %v61
  %v493 = vunpack.c.l.b16 %v62
  %v494 = vunpack.c.h.b16 %v62
  %v495 = vunpack.c.l.b16 %v63
  %v496 = vunpack.c.h.b16 %v63
  %v497 = vunpack.c.l.b16 %v64
  %v498 = vunpack.c.h.b16 %v64
  %v499 = vunpack.c.l.b16 %v65
  %v500 = vunpack.c.h.b16 %v65
  %v501 = vunpack.c.l.b16 %v66
  %v502 = vunpack.c.h.b16 %v66
  %v503 = vunpack.c.l.b16 %v67
  %v504 = vunpack.c.h.b16 %v67
  %v505 = vunpack.c.l.b16 %v68
  %v506 = vunpack.c.h.b16 %v68
  %v507 = vunpack.c.l.b16 %v69
  %v508 = vunpack.c.h.b16 %v69
  %v509 = vunpack.c.l.b16 %v70
  %v510 = vunpack.c.h.b16 %v70
  %v511 = vunpack.c.l.b16 %v71
  %v512 = vunpack.c.h.b16 %v71
  %v513 = vunpack.c.l.b16 %v72
  %v514 = vunpack.c.h.b16 %v72
  %v515 = vunpack.c.l.b16 %v73
  %v516 = vunpack.c.h.b16 %v73
  %v517 = vunpack.c.l.b16 %v74
  %v518 = vunpack.c.h.b16 %v74
  %v519 = vunpack.c.l.b16 %v75
  %v520 = vunpack.c.h.b16 %v75
  %v521 = vunpack.c.l.b16 %v76
  %v522 = vunpack.c.h.b16 %v76
  %v523 = vunpack.c.l.b16 %v77
  %v524 = vunpack.c.h.b16 %v77
  %v525 = vunpack.c.l.b16 %v78
  %v526 = vunpack.c.h.b16 %v78
  %v527 = vunpack.c.l.b16 %v79
  %v528 = vunpack.c.h.b16 %v79
  %v529 = vunpack.c.l.b16 %v80
  %v530 = vunpack.c.h.b16 %v80
  %v531 = vunpack.c.l.b16 %v81
  %v532 = vunpack.c.h.b16 %v81
  %v533 = vunpack.c.l.b16 %v82
  %v534 = vunpack.c.h.b16 %v82
  %v535 = vunpack.c.l.b16 %v83
  %v536 = vunpack.c.h.b16 %v83
  %v537 = vunpack.c.l.b16 %v84
  %v538 = vunpack.c.h.b16 %v84
  %v539 = vunpack.c.l.b16 %v85
  %v540 = vunpack.c.h.b16 %v85
  %v541 = vunpack.c.l.b16 %v86
  %v542 = vunpack.c.h.b16 %v86
  %v543 = vunpack.c.l.b16 %v87
  %v544 = vunpack.c.h.b16 %v87
  %v545 = vunpack.c.l.b16 %v88
  %v546 = vunpack.c.h.b16 %v88
  %v547 = vunpack.c.l.b16 %v89
  %v548 = vunpack.c.h.b16 %v89
  %v549 = vunpack.c.l.b16 %v90
  %v550 = vunpack.c.h.b16 %v90
  %v551 = vunpack.c.l.b16 %v91
  %v552 = vunpack.c.h.b16 %v91
  %v553 = vunpack.c.l.b16 %v92
  %v554 = vunpack.c.h.b16 %v92
  %v555 = vunpack.c.l.b16 %v93
  %v556 = vunpack.c.h.b16 %v93
  %v557 = vunpack.c.l.b16 %v94
  %v558 = vunpack.c.h.b16 %v94
  %v559 = vunpack.c.l.b16 %v95
  %v560 = vunpack.c.h.b16 %v95
  %v561 = vunpack.c.l.b16 %v96
  %v562 = vunpack.c.h.b16 %v96
  %v563 = vunpack.c.l.b16 %v97
  %v564 = vunpack.c.h.b16 %v97
  %v565 = vunpack.c.l.b16 %v98
  %v566 = vunpack.c.h.b16 %v98
  %v567 = vunpack.c.l.b16 %v99
  %v568 = vunpack.c.h.b16 %v99
  %v569 = vunpack.c.l.b16 %v100
  %v570 = vunpack.c.h.b16 %v100
  %v571 = vpack.c.b16 %v445, %v443
  %v572 = vpack.c.b16 %v446, %v444
  %v573 = vpack.c.b16 %v449, %v447
  %v574 = vpack.c.b16 %v450, %v448
  %v575 = vpack.c.b16 %v453, %v451
  %v576 = vpack.c.b16 %v454, %v452
  %v577 = vpack.c.b16 %v457, %v455
  %v578 = vpack.c.b16 %v458, %v456
  %v579 = vpack.c.b16 %v461, %v459
  %v580 = vpack.c.b16 %v462, %v460
  %v581 = vpack.c.b16 %v465, %v463
  %v582 = vpack.c.b16 %v466, %v464
  %v583 = vpack.c.b16 %v469, %v467
  %v584 = vpack.c.b16 %v470, %v468
  %v585 = vpack.c.b16 %v473, %v471
  %v586 = vpack.c.b16 %v474, %v472
  %v587 = vpack.c.b16 %v477, %v475
  %v588 = vpack.c.b16 %v478, %v476
  %v589 = vpack.c.b16 %v481, %v479
  %v590 = vpack.c.b16 %v482, %v480
  %v591 = vpack.c.b16 %v485, %v483
  %v592 = vpack.c.b16 %v486, %v484
  %v593 = vpack.c.b16 %v489, %v487
  %v594 = vpack.c.b16 %v490, %v488
  %v595 = vpack.c.b16 %v493, %v491
  %v596 = vpack.c.b16 %v494, %v492
  %v597 = vpack.c.b16 %v497, %v495
  %v598 = vpack.c.b16 %v498, %v496
  %v599 = vpack.c.b16 %v501, %v499
  %v600 = vpack.c.b16 %v502, %v500
  %v601 = vpack.c.b16 %v505, %v503
  %v602 = vpack.c.b16 %v506, %v504
  %v603 = vpack.c.b16 %v509, %v507
  %v604 = vpack.c.b16 %v510, %v508
  %v605 = vpack.c.b16 %v513, %v511
  %v606 = vpack.c.b16 %v514, %v512
  %v607 = vpack.c.b16 %v517, %v515
  %v608 = vpack.c.b16 %v518, %v516
  %v609 = vpack.c.b16 %v521, %v519
  %v610 = vpack.c.b16 %v522, %v520
  %v611 = vpack.c.b16 %v525, %v523
  %v612 = vpack.c.b16 %v526, %v524
  %v613 = vpack.c.b16 %v529, %v527
  %v614 = vpack.c.b16 %v530, %v528
  %v615 = vpack.c.b16 %v533, %v531
  %v616 = vpack.c.b16 %v534, %v532
  %v617 = vpack.c.b16 %v537, %v535
  %v618 = vpack.c.b16 %v538, %v536
  %v619 = vpack.c.b16 %v541, %v539
  %v620 = vpack.c.b16 %v542, %v540
  %v621 = vpack.c.b16 %v545, %v543
  %v622 = vpack.c.b16 %v546, %v544
  %v623 = vpack.c.b16 %v549, %v547
  %v624 = vpack.c.b16 %v550, %v548
  %v625 = vpack.c.b16 %v553, %v551
  %v626 = vpack.c.b16 %v554, %v552
  %v627 = vpack.c.b16 %v557, %v555
  %v628 = vpack.c.b16 %v558, %v556
  %v629 = vpack.c.b16 %v561, %v559
  %v630 = vpack.c.b16 %v562, %v560
  %v631 = vpack.c.b16 %v565, %v563
  %v632 = vpack.c.b16 %v566, %v564
  %v633 = vpack.c.b16 %v569, %v567
  %v634 = vpack.c.b16 %v570, %v568
  %699 = vmatprep.subr.bf16.mxu0 %v572
  %700 = vmatpush1.bf16.msra.mxu0 %v571
  %701 = vmatprep.subr.bf16.mxu0 %v574
  %702 = vmatpush1.bf16.msra.mxu0 %v573
  %703 = vmatprep.subr.bf16.mxu0 %v576
  %704 = vmatpush1.bf16.msra.mxu0 %v575
  %705 = vmatprep.subr.bf16.mxu0 %v578
  %706 = vmatpush1.bf16.msra.mxu0 %v577
  %707 = vmatprep.subr.bf16.mxu0 %v580
  %708 = vmatpush1.bf16.msra.mxu0 %v579
  %709 = vmatprep.subr.bf16.mxu0 %v582
  %710 = vmatpush1.bf16.msra.mxu0 %v581
  %711 = vmatprep.subr.bf16.mxu0 %v584
  %712 = vmatpush1.bf16.msra.mxu0 %v583
  %713 = vmatprep.subr.bf16.mxu0 %v586
  %714 = vmatpush1.bf16.msra.mxu0 %v585
  %715 = vmatprep.subr.bf16.mxu0 %v588
  %716 = vmatpush1.bf16.msra.mxu0 %v587
  %717 = vmatprep.subr.bf16.mxu0 %v590
  %718 = vmatpush1.bf16.msra.mxu0 %v589
  %719 = vmatprep.subr.bf16.mxu0 %v592
  %720 = vmatpush1.bf16.msra.mxu0 %v591
  %721 = vmatprep.subr.bf16.mxu0 %v594
  %722 = vmatpush1.bf16.msra.mxu0 %v593
  %723 = vmatprep.subr.bf16.mxu0 %v596
  %724 = vmatpush1.bf16.msra.mxu0 %v595
  %725 = vmatprep.subr.bf16.mxu0 %v598
  %726 = vmatpush1.bf16.msra.mxu0 %v597
  %727 = vmatprep.subr.bf16.mxu0 %v600
  %728 = vmatpush1.bf16.msra.mxu0 %v599
  %729 = vmatprep.subr.bf16.mxu0 %v602
  %730 = vmatpush1.bf16.msra.mxu0 %v601
  %731 = vmatprep.mubr.bf16.mxu0 %v365
  %732 = vmatmul.mubr.bf16.gmra.mrb[0].mxu0 %v364
  %v733 = vpop.f32.mrb[0].mxu0
  %v734 = vadd.f32 %v372, %v733
  %v735 = vpop.f32.mrb[0].mxu0
  %v736 = vadd.f32 %v376, %v735
  %v737 = vpop.f32.mrb[0].mxu0
  %v738 = vadd.f32 %v372, %v737
  %v739 = vpop.f32.mrb[0].mxu0
  %v740 = vadd.f32 %v376, %v739
  %741 = vdwg.mxu0
  %742 = vmatprep.subr.bf16.mxu0 %v604
  %743 = vmatpush1.bf16.msra.mxu0 %v603
  %744 = vmatprep.subr.bf16.mxu0 %v606
  %745 = vmatpush1.bf16.msra.mxu0 %v605
  %746 = vmatprep.subr.bf16.mxu0 %v608
  %747 = vmatpush1.bf16.msra.mxu0 %v607
  %748 = vmatprep.subr.bf16.mxu0 %v610
  %749 = vmatpush1.bf16.msra.mxu0 %v609
  %750 = vmatprep.subr.bf16.mxu0 %v612
  %751 = vmatpush1.bf16.msra.mxu0 %v611
  %752 = vmatprep.subr.bf16.mxu0 %v614
  %753 = vmatpush1.bf16.msra.mxu0 %v613
  %754 = vmatprep.subr.bf16.mxu0 %v616
  %755 = vmatpush1.bf16.msra.mxu0 %v615
  %756 = vmatprep.subr.bf16.mxu0 %v618
  %757 = vmatpush1.bf16.msra.mxu0 %v617
  %758 = vmatprep.subr.bf16.mxu0 %v620
  %759 = vmatpush1.bf16.msra.mxu0 %v619
  %760 = vmatprep.subr.bf16.mxu0 %v622
  %761 = vmatpush1.bf16.msra.mxu0 %v621
  %762 = vmatprep.subr.bf16.mxu0 %v624
  %763 = vmatpush1.bf16.msra.mxu0 %v623
  %764 = vmatprep.subr.bf16.mxu0 %v626
  %765 = vmatpush1.bf16.msra.mxu0 %v625
  %766 = vmatprep.subr.bf16.mxu0 %v628
  %767 = vmatpush1.bf16.msra.mxu0 %v627
  %768 = vmatprep.subr.bf16.mxu0 %v630
  %769 = vmatpush1.bf16.msra.mxu0 %v629
  %770 = vmatprep.subr.bf16.mxu0 %v632
  %771 = vmatpush1.bf16.msra.mxu0 %v631
  %772 = vmatprep.subr.bf16.mxu0 %v634
  %773 = vmatpush1.bf16.msra.mxu0 %v633
  %774 = vmatprep.mubr.bf16.mxu0 %v367
  %775 = vmatmul.mubr.bf16.gmra.mrb[0].mxu0 %v366
  %v776 = vpop.f32.mrb[0].mxu0
  %v777 = vadd.f32 %v734, %v776
  %v778 = vpop.f32.mrb[0].mxu0
  %v779 = vadd.f32 %v736, %v778
  %v780 = vpop.f32.mrb[0].mxu0
  %v781 = vadd.f32 %v738, %v780
  %v782 = vpop.f32.mrb[0].mxu0
  %v783 = vadd.f32 %v740, %v782
  %784 = vdwg.mxu0
  %785 = vst [vmem:[%s8] sm:$0xff] %v777
  %786 = vst [vmem:[%s8 + $0x8] sm:$0xff] %v779
  %787 = vst [vmem:[%s8 + $0x10] sm:$0xff] %v781
  %788 = vst [vmem:[%s8 + $0x18] sm:$0xff] %v783
  %s789 = scalar_lea.vmem %s0, 8
  %v790 = vld [vmem:[%s789] sm:$0xff]
  %v792 = vcombine.high %v790, %v790
  %v794 = vunpack.c.l.s4 1983009808
  %v795 = vunpack.c.0.s8 %v794
  %v796 = vlaneseq
  %v797 = vshrl.u32 %v796, 7
  %v798 = vsub.s32 %v795, %v797
  %v799 = vrot.slane %v790, %v798
  %v801 = vunpack.c.l.s4 1983009808
  %v802 = vunpack.c.0.s8 %v801
  %v803 = vlaneseq
  %v804 = vshrl.u32 %v803, 7
  %v805 = vsub.s32 %v802, %v804
  %v806 = vrot.slane %v792, %v805
  %v807 = vcombine.high %v799, %v799
  %v808 = vcombine.high %v806, %v806
  %v810 = vsel %vm140, %v799, 0
  %v813 = vsel %vm140, %v807, 0
  %v816 = vsel %vm140, %v806, 0
  %v819 = vsel %vm140, %v808, 0
  %821 = vmatprep.subr.bf16.mxu0 %v813
  %822 = vmatpush1.bf16.msra.mxu0 %v810
  %823 = vmatprep.subr.bf16.mxu0 0
  %824 = vmatpush1.bf16.msra.mxu0 0
  %825 = vmatprep.subr.bf16.mxu0 0
  %826 = vmatpush1.bf16.msra.mxu0 0
  %827 = vmatprep.subr.bf16.mxu0 0
  %828 = vmatpush1.bf16.msra.mxu0 0
  %829 = vmatprep.subr.bf16.mxu0 0
  %830 = vmatpush1.bf16.msra.mxu0 0
  %831 = vmatprep.subr.bf16.mxu0 0
  %832 = vmatpush1.bf16.msra.mxu0 0
  %833 = vmatprep.subr.bf16.mxu0 0
  %834 = vmatpush1.bf16.msra.mxu0 0
  %835 = vmatprep.subr.bf16.mxu0 0
  %836 = vmatpush1.bf16.msra.mxu0 0
  %837 = vmatprep.subr.bf16.mxu0 0
  %838 = vmatpush1.bf16.msra.mxu0 0
  %839 = vmatprep.subr.bf16.mxu0 0
  %840 = vmatpush1.bf16.msra.mxu0 0
  %841 = vmatprep.subr.bf16.mxu0 0
  %842 = vmatpush1.bf16.msra.mxu0 0
  %843 = vmatprep.subr.bf16.mxu0 0
  %844 = vmatpush1.bf16.msra.mxu0 0
  %845 = vmatprep.subr.bf16.mxu0 0
  %846 = vmatpush1.bf16.msra.mxu0 0
  %847 = vmatprep.subr.bf16.mxu0 0
  %848 = vmatpush1.bf16.msra.mxu0 0
  %849 = vmatprep.subr.bf16.mxu0 0
  %850 = vmatpush1.bf16.msra.mxu0 0
  %851 = vmatprep.subr.bf16.mxu0 0
  %852 = vmatpush1.bf16.msra.mxu0 0
  %853 = vmatprep.mubr.bf16.mxu0 0
  %854 = vmatmul.mubr.bf16.gmra.mrb[0].mxu0 %v138
  %v855 = vpop.f32.mrb[0].mxu0
  %v856 = vadd.f32 %v106, %v855
  %v857 = vpop.f32.mrb[0].mxu0
  %v858 = vadd.f32 %v106, %v857
  %v859 = vpop.f32.mrb[0].mxu0
  %v860 = vadd.f32 %v111, %v859
  %v861 = vpop.f32.mrb[0].mxu0
  %v862 = vadd.f32 %v111, %v861
  %863 = vdwg.mxu0
  %864 = vmatprep.subr.bf16.mxu0 %v819
  %865 = vmatpush1.bf16.msra.mxu0 %v816
  %866 = vmatprep.subr.bf16.mxu0 0
  %867 = vmatpush1.bf16.msra.mxu0 0
  %868 = vmatprep.subr.bf16.mxu0 0
  %869 = vmatpush1.bf16.msra.mxu0 0
  %870 = vmatprep.subr.bf16.mxu0 0
  %871 = vmatpush1.bf16.msra.mxu0 0
  %872 = vmatprep.subr.bf16.mxu0 0
  %873 = vmatpush1.bf16.msra.mxu0 0
  %874 = vmatprep.subr.bf16.mxu0 0
  %875 = vmatpush1.bf16.msra.mxu0 0
  %876 = vmatprep.subr.bf16.mxu0 0
  %877 = vmatpush1.bf16.msra.mxu0 0
  %878 = vmatprep.subr.bf16.mxu0 0
  %879 = vmatpush1.bf16.msra.mxu0 0
  %880 = vmatprep.subr.bf16.mxu0 0
  %881 = vmatpush1.bf16.msra.mxu0 0
  %882 = vmatprep.subr.bf16.mxu0 0
  %883 = vmatpush1.bf16.msra.mxu0 0
  %884 = vmatprep.subr.bf16.mxu0 0
  %885 = vmatpush1.bf16.msra.mxu0 0
  %886 = vmatprep.subr.bf16.mxu0 0
  %887 = vmatpush1.bf16.msra.mxu0 0
  %888 = vmatprep.subr.bf16.mxu0 0
  %889 = vmatpush1.bf16.msra.mxu0 0
  %890 = vmatprep.subr.bf16.mxu0 0
  %891 = vmatpush1.bf16.msra.mxu0 0
  %892 = vmatprep.subr.bf16.mxu0 0
  %893 = vmatpush1.bf16.msra.mxu0 0
  %894 = vmatprep.subr.bf16.mxu0 0
  %895 = vmatpush1.bf16.msra.mxu0 0
  %896 = vmatprep.mubr.bf16.mxu0 0
  %897 = vmatmul.mubr.bf16.gmra.mrb[0].mxu0 %v138
  %v898 = vpop.f32.mrb[0].mxu0
  %v899 = vadd.f32 %v106, %v898
  %v900 = vpop.f32.mrb[0].mxu0
  %v901 = vadd.f32 %v106, %v900
  %v902 = vpop.f32.mrb[0].mxu0
  %v903 = vadd.f32 %v111, %v902
  %v904 = vpop.f32.mrb[0].mxu0
  %v905 = vadd.f32 %v111, %v904
  %906 = vdwg.mxu0
  %v907 = vmax.f32 %v856, 0.0
  %v908 = vmax.f32 %v858, 0.0
  %v909 = vmax.f32 %v899, 0.0
  %v910 = vmax.f32 %v901, 0.0
  %v911 = vmax.f32 %v860, 0.0
  %v912 = vmax.f32 %v862, 0.0
  %v913 = vmax.f32 %v903, 0.0
  %v914 = vmax.f32 %v905, 0.0
  %v915 = vpack.c.bf16 %v911, %v907
  %v916 = vpack.c.bf16 %v912, %v908
  %v917 = vpack.c.bf16 %v913, %v909
  %v918 = vpack.c.bf16 %v914, %v910
  %919 = vmatprep.subr.bf16.mxu0 %v916
  %920 = vmatpush1.bf16.msra.mxu0 %v915
  %921 = vmatprep.subr.bf16.mxu0 0
  %922 = vmatpush1.bf16.msra.mxu0 0
  %923 = vmatprep.subr.bf16.mxu0 0
  %924 = vmatpush1.bf16.msra.mxu0 0
  %925 = vmatprep.subr.bf16.mxu0 0
  %926 = vmatpush1.bf16.msra.mxu0 0
  %927 = vmatprep.subr.bf16.mxu0 0
  %928 = vmatpush1.bf16.msra.mxu0 0
  %929 = vmatprep.subr.bf16.mxu0 0
  %930 = vmatpush1.bf16.msra.mxu0 0
  %931 = vmatprep.subr.bf16.mxu0 0
  %932 = vmatpush1.bf16.msra.mxu0 0
  %933 = vmatprep.subr.bf16.mxu0 0
  %934 = vmatpush1.bf16.msra.mxu0 0
  %935 = vmatprep.subr.bf16.mxu0 0
  %936 = vmatpush1.bf16.msra.mxu0 0
  %937 = vmatprep.subr.bf16.mxu0 0
  %938 = vmatpush1.bf16.msra.mxu0 0
  %939 = vmatprep.subr.bf16.mxu0 0
  %940 = vmatpush1.bf16.msra.mxu0 0
  %941 = vmatprep.subr.bf16.mxu0 0
  %942 = vmatpush1.bf16.msra.mxu0 0
  %943 = vmatprep.subr.bf16.mxu0 0
  %944 = vmatpush1.bf16.msra.mxu0 0
  %945 = vmatprep.subr.bf16.mxu0 0
  %946 = vmatpush1.bf16.msra.mxu0 0
  %947 = vmatprep.subr.bf16.mxu0 0
  %948 = vmatpush1.bf16.msra.mxu0 0
  %949 = vmatprep.subr.bf16.mxu0 0
  %950 = vmatpush1.bf16.msra.mxu0 0
  %951 = vmatprep.mubr.bf16.mxu0 0
  %952 = vmatmul.mubr.bf16.gmra.mrb[0].mxu0 %v268
  %v953 = vpop.f32.mrb[0].mxu0
  %v954 = vadd.f32 %v254, %v953
  %v955 = vpop.f32.mrb[0].mxu0
  %v956 = vadd.f32 %v254, %v955
  %v957 = vpop.f32.mrb[0].mxu0
  %v958 = vadd.f32 %v259, %v957
  %v959 = vpop.f32.mrb[0].mxu0
  %v960 = vadd.f32 %v259, %v959
  %961 = vdwg.mxu0
  %962 = vmatprep.subr.bf16.mxu0 %v918
  %963 = vmatpush1.bf16.msra.mxu0 %v917
  %964 = vmatprep.subr.bf16.mxu0 0
  %965 = vmatpush1.bf16.msra.mxu0 0
  %966 = vmatprep.subr.bf16.mxu0 0
  %967 = vmatpush1.bf16.msra.mxu0 0
  %968 = vmatprep.subr.bf16.mxu0 0
  %969 = vmatpush1.bf16.msra.mxu0 0
  %970 = vmatprep.subr.bf16.mxu0 0
  %971 = vmatpush1.bf16.msra.mxu0 0
  %972 = vmatprep.subr.bf16.mxu0 0
  %973 = vmatpush1.bf16.msra.mxu0 0
  %974 = vmatprep.subr.bf16.mxu0 0
  %975 = vmatpush1.bf16.msra.mxu0 0
  %976 = vmatprep.subr.bf16.mxu0 0
  %977 = vmatpush1.bf16.msra.mxu0 0
  %978 = vmatprep.subr.bf16.mxu0 0
  %979 = vmatpush1.bf16.msra.mxu0 0
  %980 = vmatprep.subr.bf16.mxu0 0
  %981 = vmatpush1.bf16.msra.mxu0 0
  %982 = vmatprep.subr.bf16.mxu0 0
  %983 = vmatpush1.bf16.msra.mxu0 0
  %984 = vmatprep.subr.bf16.mxu0 0
  %985 = vmatpush1.bf16.msra.mxu0 0
  %986 = vmatprep.subr.bf16.mxu0 0
  %987 = vmatpush1.bf16.msra.mxu0 0
  %988 = vmatprep.subr.bf16.mxu0 0
  %989 = vmatpush1.bf16.msra.mxu0 0
  %990 = vmatprep.subr.bf16.mxu0 0
  %991 = vmatpush1.bf16.msra.mxu0 0
  %992 = vmatprep.subr.bf16.mxu0 0
  %993 = vmatpush1.bf16.msra.mxu0 0
  %994 = vmatprep.mubr.bf16.mxu0 0
  %995 = vmatmul.mubr.bf16.gmra.mrb[0].mxu0 %v268
  %v996 = vpop.f32.mrb[0].mxu0
  %v997 = vadd.f32 %v254, %v996
  %v998 = vpop.f32.mrb[0].mxu0
  %v999 = vadd.f32 %v254, %v998
  %v1000 = vpop.f32.mrb[0].mxu0
  %v1001 = vadd.f32 %v259, %v1000
  %v1002 = vpop.f32.mrb[0].mxu0
  %v1003 = vadd.f32 %v259, %v1002
  %1004 = vdwg.mxu0
  %s1005 = scalar_lea.vmem %s7, 64
  %1006 = vst [vmem:[%s1005] sm:$0xff] %v954
  %1007 = vst [vmem:[%s1005 + $0x8] sm:$0xff] %v956
  %1008 = vst [vmem:[%s1005 + $0x10] sm:$0xff] %v997
  %1009 = vst [vmem:[%s1005 + $0x18] sm:$0xff] %v999
  %1010 = vst [vmem:[%s1005 + $0x20] sm:$0xff] %v958
  %1011 = vst [vmem:[%s1005 + $0x28] sm:$0xff] %v960
  %1012 = vst [vmem:[%s1005 + $0x30] sm:$0xff] %v1001
  %1013 = vst [vmem:[%s1005 + $0x38] sm:$0xff] %v1003
  %v1014 = vpack.c.bf16 %v958, %v954
  %v1015 = vpack.c.bf16 %v960, %v956
  %v1016 = vpack.c.bf16 %v1001, %v997
  %v1017 = vpack.c.bf16 %v1003, %v999
  %1018 = vmatprep.subr.bf16.mxu0 %v572
  %1019 = vmatpush1.bf16.msra.mxu0 %v571
  %1020 = vmatprep.subr.bf16.mxu0 %v574
  %1021 = vmatpush1.bf16.msra.mxu0 %v573
  %1022 = vmatprep.subr.bf16.mxu0 %v576
  %1023 = vmatpush1.bf16.msra.mxu0 %v575
  %1024 = vmatprep.subr.bf16.mxu0 %v578
  %1025 = vmatpush1.bf16.msra.mxu0 %v577
  %1026 = vmatprep.subr.bf16.mxu0 %v580
  %1027 = vmatpush1.bf16.msra.mxu0 %v579
  %1028 = vmatprep.subr.bf16.mxu0 %v582
  %1029 = vmatpush1.bf16.msra.mxu0 %v581
  %1030 = vmatprep.subr.bf16.mxu0 %v584
  %1031 = vmatpush1.bf16.msra.mxu0 %v583
  %1032 = vmatprep.subr.bf16.mxu0 %v586
  %1033 = vmatpush1.bf16.msra.mxu0 %v585
  %1034 = vmatprep.subr.bf16.mxu0 %v588
  %1035 = vmatpush1.bf16.msra.mxu0 %v587
  %1036 = vmatprep.subr.bf16.mxu0 %v590
  %1037 = vmatpush1.bf16.msra.mxu0 %v589
  %1038 = vmatprep.subr.bf16.mxu0 %v592
  %1039 = vmatpush1.bf16.msra.mxu0 %v591
  %1040 = vmatprep.subr.bf16.mxu0 %v594
  %1041 = vmatpush1.bf16.msra.mxu0 %v593
  %1042 = vmatprep.subr.bf16.mxu0 %v596
  %1043 = vmatpush1.bf16.msra.mxu0 %v595
  %1044 = vmatprep.subr.bf16.mxu0 %v598
  %1045 = vmatpush1.bf16.msra.mxu0 %v597
  %1046 = vmatprep.subr.bf16.mxu0 %v600
  %1047 = vmatpush1.bf16.msra.mxu0 %v599
  %1048 = vmatprep.subr.bf16.mxu0 %v602
  %1049 = vmatpush1.bf16.msra.mxu0 %v601
  %1050 = vmatprep.mubr.bf16.mxu0 %v1015
  %1051 = vmatmul.mubr.bf16.gmra.mrb[0].mxu0 %v1014
  %v1052 = vpop.f32.mrb[0].mxu0
  %v1053 = vadd.f32 %v372, %v1052
  %v1054 = vpop.f32.mrb[0].mxu0
  %v1055 = vadd.f32 %v376, %v1054
  %v1056 = vpop.f32.mrb[0].mxu0
  %v1057 = vadd.f32 %v372, %v1056
  %v1058 = vpop.f32.mrb[0].mxu0
  %v1059 = vadd.f32 %v376, %v1058
  %1060 = vdwg.mxu0
  %1061 = vmatprep.subr.bf16.mxu0 %v604
  %1062 = vmatpush1.bf16.msra.mxu0 %v603
  %1063 = vmatprep.subr.bf16.mxu0 %v606
  %1064 = vmatpush1.bf16.msra.mxu0 %v605
  %1065 = vmatprep.subr.bf16.mxu0 %v608
  %1066 = vmatpush1.bf16.msra.mxu0 %v607
  %1067 = vmatprep.subr.bf16.mxu0 %v610
  %1068 = vmatpush1.bf16.msra.mxu0 %v609
  %1069 = vmatprep.subr.bf16.mxu0 %v612
  %1070 = vmatpush1.bf16.msra.mxu0 %v611
  %1071 = vmatprep.subr.bf16.mxu0 %v614
  %1072 = vmatpush1.bf16.msra.mxu0 %v613
  %1073 = vmatprep.subr.bf16.mxu0 %v616
  %1074 = vmatpush1.bf16.msra.mxu0 %v615
  %1075 = vmatprep.subr.bf16.mxu0 %v618
  %1076 = vmatpush1.bf16.msra.mxu0 %v617
  %1077 = vmatprep.subr.bf16.mxu0 %v620
  %1078 = vmatpush1.bf16.msra.mxu0 %v619
  %1079 = vmatprep.subr.bf16.mxu0 %v622
  %1080 = vmatpush1.bf16.msra.mxu0 %v621
  %1081 = vmatprep.subr.bf16.mxu0 %v624
  %1082 = vmatpush1.bf16.msra.mxu0 %v623
  %1083 = vmatprep.subr.bf16.mxu0 %v626
  %1084 = vmatpush1.bf16.msra.mxu0 %v625
  %1085 = vmatprep.subr.bf16.mxu0 %v628
  %1086 = vmatpush1.bf16.msra.mxu0 %v627
  %1087 = vmatprep.subr.bf16.mxu0 %v630
  %1088 = vmatpush1.bf16.msra.mxu0 %v629
  %1089 = vmatprep.subr.bf16.mxu0 %v632
  %1090 = vmatpush1.bf16.msra.mxu0 %v631
  %1091 = vmatprep.subr.bf16.mxu0 %v634
  %1092 = vmatpush1.bf16.msra.mxu0 %v633
  %1093 = vmatprep.mubr.bf16.mxu0 %v1017
  %1094 = vmatmul.mubr.bf16.gmra.mrb[0].mxu0 %v1016
  %v1095 = vpop.f32.mrb[0].mxu0
  %v1096 = vadd.f32 %v1053, %v1095
  %v1097 = vpop.f32.mrb[0].mxu0
  %v1098 = vadd.f32 %v1055, %v1097
  %v1099 = vpop.f32.mrb[0].mxu0
  %v1100 = vadd.f32 %v1057, %v1099
  %v1101 = vpop.f32.mrb[0].mxu0
  %v1102 = vadd.f32 %v1059, %v1101
  %1103 = vdwg.mxu0
  %s1104 = scalar_lea.vmem %s8, 32
  %1105 = vst [vmem:[%s1104] sm:$0xff] %v1096
  %1106 = vst [vmem:[%s1104 + $0x8] sm:$0xff] %v1098
  %1107 = vst [vmem:[%s1104 + $0x10] sm:$0xff] %v1100
  %1108 = vst [vmem:[%s1104 + $0x18] sm:$0xff] %v1102
  // Predicated region
  $region30: #{forward.1} parent=0 // pred_check
    _
  $region31: #{forward.1} parent=0 // pred_check_branch
    %1110 = sbr.rel (0) target = $region33
  $region32: #{forward.1} parent=0 // pred_region
    _
  $region33: #{forward.1} parent=0 // pred_fallthru
    _
  // Predicated region
  $region34: #{forward.1} parent=0 // pred_check
    _
  $region35: #{forward.1} parent=0 // pred_check_branch
    %1112 = sbr.rel (0) target = $region37
  $region36: #{forward.1} parent=0 // pred_region
    _
  $region37: #{forward.1} parent=0 // pred_fallthru
    _
  // Predicated region
  $region38: #{forward.1} parent=0 // pred_check
    _
  $region39: #{forward.1} parent=0 // pred_check_branch
    %1114 = sbr.rel (0) target = $region41
  $region40: #{forward.1} parent=0 // pred_region
    _
  $region41: #{forward.1} parent=0 // pred_fallthru
    _
  // Predicated region
  $region42: #{forward.1} parent=0 // pred_check
    _
  $region43: #{forward.1} parent=0 // pred_check_branch
    %1116 = sbr.rel (0) target = $region45
  $region44: #{forward.1} parent=0 // pred_region
    _
  $region45: #{forward.1} parent=0 // pred_fallthru
    _

</llo_original>
